<compile_context>
chip_gen: v7x
topology: tpu7x:2x2x1
jax: 0.10.0
libtpu: 0.0.40
codegen_flags: <defaults>
</compile_context>

<pallas_src>
import functools

import jax
import jax.numpy as jnp
from jax.experimental import pallas as pl
from jax.experimental.pallas import tpu as pltpu

_LANES = 128


def _partials_kernel(x_ref, y_ref, acc_ref, *, inner_tiles, tile_rows, slab,
                     total_rows, mask_rows, unroll):
    p = pl.program_id(0)   # parallel slice (one per TensorCore on v7x)
    j = pl.program_id(1)   # arbitrary (reduction) axis

    @pl.when(j == 0)
    def _init():
        acc_ref[...] = jnp.zeros_like(acc_ref)

    n_slabs = tile_rows // slab
    if mask_rows:
        # Valid rows remaining at the start of this logical block; <= 0 for a
        # (clamped) fully out-of-range block so its contribution is zeroed.
        rows_left = total_rows - (p * inner_tiles + j) * tile_rows
        row_ids = jax.lax.broadcasted_iota(jnp.int32, (slab, _LANES), 0)

    def body(s, carry):
        axy, axx, ayy = carry
        r0 = pl.multiple_of(s * slab, slab)
        xs = x_ref[pl.ds(r0, slab), :].astype(jnp.float32)
        ys = y_ref[pl.ds(r0, slab), :].astype(jnp.float32)
        if mask_rows:
            valid = row_ids < (rows_left - r0)
            xs = jnp.where(valid, xs, 0.0)
            ys = jnp.where(valid, ys, 0.0)
        return (axy + xs * ys, axx + xs * xs, ayy + ys * ys)

    zero = jnp.zeros((slab, _LANES), jnp.float32)
    axy, axx, ayy = jax.lax.fori_loop(0, n_slabs, body, (zero, zero, zero),
                                      unroll=unroll)
    acc_ref[0, 0] += axy   # partial dot(x, y)
    acc_ref[0, 1] += axx   # partial ||x||^2
    acc_ref[0, 2] += ayy   # partial ||y||^2


def cosine_threshold_loss(output, target, *, threshold_target, threshold_min,
                          threshold_max, eps=1e-8, tile_rows=2048):
    """Pallas implementation of CosineThresholdLoss.forward.

    output, target: (1, D) (or flat (D,)) arrays, f32 or bf16.
    Returns a scalar float32 loss. threshold_max is stored by the PyTorch
    module but unused in its forward.
    """
    del threshold_max  # unused in the PyTorch forward
    assert output.shape == target.shape
    if output.ndim >= 2:
        # cosine_similarity reduces dim=1; the Python `if` needs a scalar.
        assert output.shape[0] == 1, "forward requires batch == 1"

    x = output.reshape(-1)
    y = target.reshape(-1)
    d = x.shape[0]
    itemsize = jnp.dtype(x.dtype).itemsize
    packing = max(1, 4 // itemsize)
    slab = 8 * packing            # (8,128) f32 slab; (16,128) packed bf16 slab

    # Lane-dense (rows, 128) view.  Pad only the sub-128 remainder (zeros do
    # not change dot / norms); when D % 128 == 0 the reshape is a free bitcast.
    rem = (-d) % _LANES
    if rem:
        x = jnp.pad(x, (0, rem))
        y = jnp.pad(y, (0, rem))
    rows = (d + rem) // _LANES
    x2 = x.reshape(rows, _LANES)
    y2 = y.reshape(rows, _LANES)

    # Tile height: multiple of the packed slab, capped so the double-buffered
    # VMEM footprint (2 inputs x 2 buffers) stays <= ~12 MiB (safe on v5e's
    # 16 MiB default scoped VMEM), and no bigger than the input needs.
    rows_ceil = ((rows + slab - 1) // slab) * slab
    max_tr = (12 * 1024 * 1024) // (4 * _LANES * itemsize)
    tr = max(slab, (min(int(tile_rows), max_tr, rows_ceil) // slab) * slab)

    total_blocks = pl.cdiv(rows, tr)
    num_slices = 2 if total_blocks >= 2 else 1   # one slice per TC on v7x
    inner_tiles = pl.cdiv(total_blocks, num_slices)
    last_block = total_blocks - 1
    # Row masking is needed whenever the grid over-covers the (rows, 128) view
    # (ragged last block and/or a clamped out-of-range block).
    mask_rows = (num_slices * inner_tiles * tr) != rows

    n_slabs = tr // slab
    unroll = next(u for u in (8, 4, 2, 1) if n_slabs % u == 0)

    kernel = functools.partial(
        _partials_kernel,
        inner_tiles=inner_tiles, tile_rows=tr, slab=slab,
        total_rows=rows, mask_rows=mask_rows, unroll=unroll)

    def in_map(p, j):
        # Clamp so a (rare) fully out-of-range block re-reads the last valid
        # block; its contribution is zeroed by the in-kernel row mask.
        return (jnp.minimum(p * inner_tiles + j, last_block), 0)

    partials = pl.pallas_call(
        kernel,
        out_shape=jax.ShapeDtypeStruct((num_slices, 3, slab, _LANES),
                                       jnp.float32),
        grid=(num_slices, inner_tiles),
        in_specs=[pl.BlockSpec((tr, _LANES), in_map),
                  pl.BlockSpec((tr, _LANES), in_map)],
        out_specs=pl.BlockSpec((1, 3, slab, _LANES),
                               lambda p, j: (p, 0, 0, 0)),
        compiler_params=pltpu.CompilerParams(
            dimension_semantics=("parallel", "arbitrary")),
        cost_estimate=pl.CostEstimate(
            flops=6 * rows * _LANES,
            transcendentals=0,
            bytes_accessed=2 * rows * _LANES * itemsize),
    )(x2, y2)

    # Tiny finalize (few-thousand-element reduce + one sqrt) in plain XLA.
    sums = jnp.sum(partials, axis=(0, 2, 3))
    dot, nx2, ny2 = sums[0], sums[1], sums[2]
    cos = dot / jnp.maximum(jnp.sqrt(nx2 * ny2), eps)
    return jnp.where(
        cos > 0.9, cos - 0.9,
        jnp.where(cos > threshold_target, 0.0,
                  jnp.where(cos > threshold_min, 0.0, threshold_min - cos)))


def _reference(output, target, threshold_target, threshold_min, eps=1e-8):
    x = output.astype(jnp.float32).reshape(1, -1)
    y = target.astype(jnp.float32).reshape(1, -1)
    dot = jnp.sum(x * y, axis=1)
    cos = dot / jnp.maximum(
        jnp.linalg.norm(x, axis=1) * jnp.linalg.norm(y, axis=1), eps)
    cos = cos[0]
    return jnp.where(
        cos > 0.9, cos - 0.9,
        jnp.where(cos > threshold_target, 0.0,
                  jnp.where(cos > threshold_min, 0.0, threshold_min - cos)))


if __name__ == "__main__":
    threshold_target = 0.7
    threshold_min = 0.3
    threshold_max = 0.95  # stored by the module, unused in forward

    key = jax.random.PRNGKey(0)
    ks = jax.random.split(key, 8)

    # 1) Tiny shape the module implies (B=1, D=32): sub-128 pad + masked block.
    out_s = jax.random.normal(ks[0], (1, 32), dtype=jnp.float32)
    tgt_s = jax.random.normal(ks[1], (1, 32), dtype=jnp.float32)
    got = jax.block_until_ready(cosine_threshold_loss(
        out_s, tgt_s, threshold_target=threshold_target,
        threshold_min=threshold_min, threshold_max=threshold_max))
    ref = _reference(out_s, tgt_s, threshold_target, threshold_min)
    assert jnp.allclose(got, ref, atol=1e-5), (got, ref)

    # 2) Multi-block, even block count: exercises the 2-slice (dual-core on
    #    v7x) grid with an exact fit; correlated inputs hit the cos>0.9 arm.
    D = 8192
    out_b = jax.random.normal(ks[2], (1, D), dtype=jnp.float32)
    tgt_b = out_b + 0.1 * jax.random.normal(ks[3], (1, D), dtype=jnp.float32)
    got = jax.block_until_ready(cosine_threshold_loss(
        out_b, tgt_b, threshold_target=threshold_target,
        threshold_min=threshold_min, threshold_max=threshold_max,
        tile_rows=16))
    ref = _reference(out_b, tgt_b, threshold_target, threshold_min)
    assert jnp.allclose(got, ref, atol=1e-4), (got, ref)

    # 3) Odd block count: exercises the clamped out-of-range block + row mask.
    D = 5 * 16 * 128
    out_o = jax.random.normal(ks[4], (1, D), dtype=jnp.float32)
    tgt_o = jax.random.normal(ks[5], (1, D), dtype=jnp.float32)
    got = jax.block_until_ready(cosine_threshold_loss(
        out_o, tgt_o, threshold_target=threshold_target,
        threshold_min=threshold_min, threshold_max=threshold_max,
        tile_rows=16))
    ref = _reference(out_o, tgt_o, threshold_target, threshold_min)
    assert jnp.allclose(got, ref, atol=1e-4), (got, ref)

    # 4) bf16 inputs: (16,128) packed slabs widened to f32 per slab in-kernel.
    out_h = jax.random.normal(ks[6], (1, 2048), dtype=jnp.bfloat16)
    tgt_h = jax.random.normal(ks[7], (1, 2048), dtype=jnp.bfloat16)
    got = jax.block_until_ready(cosine_threshold_loss(
        out_h, tgt_h, threshold_target=threshold_target,
        threshold_min=threshold_min, threshold_max=threshold_max))
    ref = _reference(out_h, tgt_h, threshold_target, threshold_min)
    assert jnp.allclose(got, ref, atol=1e-4), (got, ref)

    print("KERNEL_OK")
</pallas_src>

<mosaic_0001>
module attributes {stable_mosaic.version = 11 : i64} {
  func.func @_partials_kernel(%arg0: i32, %arg1: i32, %arg2: memref<8x128xf32, #tpu.memory_space<vmem>>, %arg3: memref<8x128xf32, #tpu.memory_space<vmem>>, %arg4: memref<1x3x8x128xf32, #tpu.memory_space<vmem>>) attributes {dimension_semantics = [#tpu.dimension_semantics<parallel>, #tpu.dimension_semantics<arbitrary>], iteration_bounds = array<i64: 1, 1>, scalar_prefetch = 0 : i64, scratch_operands = 0 : i64, tpu.core_type = #tpu.core_type<tc>, window_params = [{transform_indices = @transform_0, window_bounds = array<i64: 8, 128>}, {transform_indices = @transform_1, window_bounds = array<i64: 8, 128>}, {transform_indices = @transform_2, window_bounds = array<i64: 1, 3, 8, 128>}]} {
    %c0_i32 = arith.constant 0 : i32
    %0 = arith.cmpi eq, %arg1, %c0_i32 : i32
    %1 = arith.extui %0 : i1 to i32
    %c0_i32_0 = arith.constant 0 : i32
    %2 = arith.cmpi ne, %1, %c0_i32_0 : i32
    scf.if %2 {
      %cst_30 = arith.constant 0.000000e+00 : f32
      %46 = vector.broadcast %cst_30 : f32 to vector<1x3x8x128xf32>
      %c0_31 = arith.constant 0 : index
      %c0_32 = arith.constant 0 : index
      %c0_33 = arith.constant 0 : index
      %c0_34 = arith.constant 0 : index
      %47 = vector.load %arg4[%c0_31, %c0_32, %c0_33, %c0_34] : memref<1x3x8x128xf32, #tpu.memory_space<vmem>>, vector<1x3x8x128xf32>
      tpu.vector_store %arg4[%c0_31, %c0_32, %c0_33, %c0_34], %46 {strides = array<i32>} : memref<1x3x8x128xf32, #tpu.memory_space<vmem>>, vector<1x3x8x128xf32>,
    } else {
    }
    %c1_i32 = arith.constant 1 : i32
    %3 = arith.muli %arg0, %c1_i32 : i32
    %4 = arith.addi %3, %arg1 : i32
    %c8_i32 = arith.constant 8 : i32
    %5 = arith.muli %4, %c8_i32 : i32
    %c1_i32_1 = arith.constant 1 : i32
    %6 = arith.subi %c1_i32_1, %5 : i32
    %7 = tpu.iota {dimensions = array<i32: 0>} : vector<8x128xi32>
    %cst = arith.constant 0.000000e+00 : f32
    %8 = vector.broadcast %cst : f32 to vector<8x128xf32>
    %c0_i32_2 = arith.constant 0 : i32
    %c8_i32_3 = arith.constant 8 : i32
    %9 = arith.muli %c0_i32_2, %c8_i32_3 : i32
    %10 = tpu.assume_multiple %9, 8 : i32
    %11 = arith.index_cast %10 : i32 to index
    %c0 = arith.constant 0 : index
    %12 = vector.load %arg2[%11, %c0] : memref<8x128xf32, #tpu.memory_space<vmem>>, vector<8x128xf32>
    %13 = arith.index_cast %10 : i32 to index
    %c0_4 = arith.constant 0 : index
    %14 = vector.load %arg3[%13, %c0_4] : memref<8x128xf32, #tpu.memory_space<vmem>>, vector<8x128xf32>
    %15 = arith.subi %6, %10 : i32
    %16 = vector.broadcast %15 : i32 to vector<8x128xi32>
    %17 = arith.cmpi slt, %7, %16 : vector<8x128xi32>
    %cst_5 = arith.constant 0.000000e+00 : f32
    %18 = vector.broadcast %cst_5 : f32 to vector<8x128xf32>
    %19 = arith.select %17, %12, %18 : vector<8x128xi1>, vector<8x128xf32>
    %cst_6 = arith.constant 0.000000e+00 : f32
    %20 = vector.broadcast %cst_6 : f32 to vector<8x128xf32>
    %21 = arith.select %17, %14, %20 : vector<8x128xi1>, vector<8x128xf32>
    %22 = arith.mulf %19, %21 : vector<8x128xf32>
    %23 = arith.addf %8, %22 : vector<8x128xf32>
    %24 = arith.mulf %19, %19 : vector<8x128xf32>
    %25 = arith.addf %8, %24 : vector<8x128xf32>
    %26 = arith.mulf %21, %21 : vector<8x128xf32>
    %27 = arith.addf %8, %26 : vector<8x128xf32>
    %c1_i32_7 = arith.constant 1 : i32
    %c0_8 = arith.constant 0 : index
    %c0_9 = arith.constant 0 : index
    %c0_10 = arith.constant 0 : index
    %c0_11 = arith.constant 0 : index
    %28 = vector.load %arg4[%c0_8, %c0_9, %c0_10, %c0_11] : memref<1x3x8x128xf32, #tpu.memory_space<vmem>>, vector<1x1x8x128xf32>
    %29 = vector.shape_cast %28 : vector<1x1x8x128xf32> to vector<8x128xf32>
    %30 = arith.addf %29, %23 : vector<8x128xf32>
    %c0_12 = arith.constant 0 : index
    %c0_13 = arith.constant 0 : index
    %c0_14 = arith.constant 0 : index
    %c0_15 = arith.constant 0 : index
    %31 = vector.load %arg4[%c0_12, %c0_13, %c0_14, %c0_15] : memref<1x3x8x128xf32, #tpu.memory_space<vmem>>, vector<1x1x8x128xf32>
    %32 = vector.shape_cast %31 : vector<1x1x8x128xf32> to vector<8x128xf32>
    %33 = vector.shape_cast %30 : vector<8x128xf32> to vector<1x1x8x128xf32>
    tpu.vector_store %arg4[%c0_12, %c0_13, %c0_14, %c0_15], %33 {strides = array<i32>} : memref<1x3x8x128xf32, #tpu.memory_space<vmem>>, vector<1x1x8x128xf32>,
    %c0_16 = arith.constant 0 : index
    %c1 = arith.constant 1 : index
    %c0_17 = arith.constant 0 : index
    %c0_18 = arith.constant 0 : index
    %34 = vector.load %arg4[%c0_16, %c1, %c0_17, %c0_18] : memref<1x3x8x128xf32, #tpu.memory_space<vmem>>, vector<1x1x8x128xf32>
    %35 = vector.shape_cast %34 : vector<1x1x8x128xf32> to vector<8x128xf32>
    %36 = arith.addf %35, %25 : vector<8x128xf32>
    %c0_19 = arith.constant 0 : index
    %c1_20 = arith.constant 1 : index
    %c0_21 = arith.constant 0 : index
    %c0_22 = arith.constant 0 : index
    %37 = vector.load %arg4[%c0_19, %c1_20, %c0_21, %c0_22] : memref<1x3x8x128xf32, #tpu.memory_space<vmem>>, vector<1x1x8x128xf32>
    %38 = vector.shape_cast %37 : vector<1x1x8x128xf32> to vector<8x128xf32>
    %39 = vector.shape_cast %36 : vector<8x128xf32> to vector<1x1x8x128xf32>
    tpu.vector_store %arg4[%c0_19, %c1_20, %c0_21, %c0_22], %39 {strides = array<i32>} : memref<1x3x8x128xf32, #tpu.memory_space<vmem>>, vector<1x1x8x128xf32>,
    %c0_23 = arith.constant 0 : index
    %c2 = arith.constant 2 : index
    %c0_24 = arith.constant 0 : index
    %c0_25 = arith.constant 0 : index
    %40 = vector.load %arg4[%c0_23, %c2, %c0_24, %c0_25] : memref<1x3x8x128xf32, #tpu.memory_space<vmem>>, vector<1x1x8x128xf32>
    %41 = vector.shape_cast %40 : vector<1x1x8x128xf32> to vector<8x128xf32>
    %42 = arith.addf %41, %27 : vector<8x128xf32>
    %c0_26 = arith.constant 0 : index
    %c2_27 = arith.constant 2 : index
    %c0_28 = arith.constant 0 : index
    %c0_29 = arith.constant 0 : index
    %43 = vector.load %arg4[%c0_26, %c2_27, %c0_28, %c0_29] : memref<1x3x8x128xf32, #tpu.memory_space<vmem>>, vector<1x1x8x128xf32>
    %44 = vector.shape_cast %43 : vector<1x1x8x128xf32> to vector<8x128xf32>
    %45 = vector.shape_cast %42 : vector<8x128xf32> to vector<1x1x8x128xf32>
    tpu.vector_store %arg4[%c0_26, %c2_27, %c0_28, %c0_29], %45 {strides = array<i32>} : memref<1x3x8x128xf32, #tpu.memory_space<vmem>>, vector<1x1x8x128xf32>,
    return
  }
  func.func @transform_0(%arg0: i32, %arg1: i32) -> (i32, i32) {
    %c1_i32 = arith.constant 1 : i32
    %0 = arith.muli %arg0, %c1_i32 : i32
    %1 = arith.addi %0, %arg1 : i32
    %c0_i32 = arith.constant 0 : i32
    %2 = arith.minsi %1, %c0_i32 : i32
    %c0_i32_0 = arith.constant 0 : i32
    %c0_i32_1 = arith.constant 0 : i32
    return %2, %c0_i32_0 : i32, i32
  }
  func.func @transform_1(%arg0: i32, %arg1: i32) -> (i32, i32) {
    %c1_i32 = arith.constant 1 : i32
    %0 = arith.muli %arg0, %c1_i32 : i32
    %1 = arith.addi %0, %arg1 : i32
    %c0_i32 = arith.constant 0 : i32
    %2 = arith.minsi %1, %c0_i32 : i32
    %c0_i32_0 = arith.constant 0 : i32
    %c0_i32_1 = arith.constant 0 : i32
    return %2, %c0_i32_0 : i32, i32
  }
  func.func @transform_2(%arg0: i32, %arg1: i32) -> (i32, i32, i32, i32) {
    %c0_i32 = arith.constant 0 : i32
    %c0_i32_0 = arith.constant 0 : i32
    %c0_i32_1 = arith.constant 0 : i32
    %c0_i32_2 = arith.constant 0 : i32
    return %arg0, %c0_i32, %c0_i32_0, %c0_i32_1 : i32, i32, i32, i32
  }
}

</mosaic_0001>

<llo_original>
// kernel: tpu_custom_call.1
$region0: #{tpu_custom_call.1}
  #allocation0 [shape = 'u32[]', space=smem, size = 0x4, offset = 0x4, fixed_abs, tag = 'smem constant byte address 0x4 - core index']
  #allocation1 [shape = 'u32[144,128]{1,0:T(1,128)}', space=vmem, size = 0x12000, scoped, tag = 'internal scratch']
  %s0 = inlined_call_operand.hbm [shape: f32[1,128], index: 0, kind: input, shape index: {}]
  %s1 = inlined_call_operand.vmem [shape: f32[1,128], index: 1, kind: input, shape index: {}]
  %s2 = inlined_call_operand.hbm [shape: f32[1,3,8,128], index: 2, kind: output, shape index: {}]
  %s3 = sld [smem:[#allocation0]]
  $region26: #{tpu_custom_call.1} parent=0
    _
  %s5 = ssub.s32 1, %s3
  %s6 = scalar_select 0, %s5, %s3
  $region1: #{tpu_custom_call.1} parent=0
    #allocation2 [shape = 'u8[4096]{0}', space=vmem, size = 0x1000, scoped, tag = 'input window, operand 0, single buffered']
    #allocation3 [shape = 's32[1]{0}', space=sflag, size = 0x4, scoped, tag = 'scoped memory for tpu_custom_call.1']
    #allocation4 [shape = 's32[1]{0}', space=sflag, size = 0x4, scoped, tag = 'scoped memory for tpu_custom_call.1']
    #allocation5 [shape = 'u8[12288]{0}', space=vmem, size = 0x3000, scoped, tag = 'output window, operand 0, single buffered']
    %7 = vsyncpa [#allocation3], 0
    %8 = vsyncpa [#allocation4], 0
    // Predicated region
    $region2: #{tpu_custom_call.1} parent=1 // pred_check
      _
    $region3: #{tpu_custom_call.1} parent=1 // pred_check_branch
      %10 = sbr.rel (0) target = $region5
    $region4: #{tpu_custom_call.1} parent=1 // pred_region
      %s11 = sadd.s32 0, 0
      %p12 = scmp.lt.s32.totalorder %s11, 0
      %s13 = scalar_select %p12, %s11, 0
      %s14 = smul.u32 8, %s13
      %s15 = ssub.s32 1, %s14
      %s16 = smul.u32 16, %s15
      %s18 = ssub.s32 128, %s16
      %19 = vsyncadd [#allocation3], %s18
      %p20 = scmp.ne.s32.totalorder 0, %s16
      %s21 = smul.addr %s14, 16
      %s22 = scalar_lea.hbm %s0, %s21
      %s23 = sshll.u32 [#allocation2], 4
      %s24 = int_to_ptr.vmem [resolvable:$true] %s23
      %s25 = sshll.u32 %s15, 4
      %29 = dma.hbm_to_vmem [thread:$0]  (%p20), %s22, %s25, %s24, [#allocation3], 16, 16, 1
    $region5: #{tpu_custom_call.1} parent=1 // pred_fallthru
      _
    // Predicated region
    $region6: #{tpu_custom_call.1} parent=1 // pred_check
      _
    $region7: #{tpu_custom_call.1} parent=1 // pred_check_branch
      %31 = sbr.rel (0) target = $region9
    $region8: #{tpu_custom_call.1} parent=1 // pred_region
      %s32 = sadd.s32 0, 0
      %p33 = scmp.lt.s32.totalorder %s32, 0
      %s34 = scalar_select %p33, %s32, 0
      %s35 = smul.u32 8, %s34
      %s36 = ssub.s32 1, %s35
      %s37 = smul.u32 16, %s36
      %p38 = scmp.lt.s32.totalorder %s35, 0
      %s39 = scalar_select %p38, %s35, 0
      %s40 = scalar_lea.vmem %s1, %s39
      %s41 = sadd.s32 0, 0
      %p42 = scmp.lt.s32.totalorder %s41, 0
      %s43 = scalar_select %p42, %s41, 0
      %s44 = smul.u32 8, %s43
      %s45 = ssub.s32 1, %s44
      %s46 = smul.u32 16, %s45
    $region9: #{tpu_custom_call.1} parent=1 // pred_fallthru
      _
    // Predicated region
    $region10: #{tpu_custom_call.1} parent=1 // pred_check
      _
    $region11: #{tpu_custom_call.1} parent=1 // pred_check_branch
      %48 = sbr.rel (0) target = $region13
    $region12: #{tpu_custom_call.1} parent=1 // pred_region
      %49 = dma.done [#allocation3], 128
    $region13: #{tpu_custom_call.1} parent=1 // pred_fallthru
      _
    %s50 = sadd.s32 0, 0
    %p51 = scmp.lt.s32.totalorder %s50, 0
    %s52 = scalar_select %p51, %s50, 0
    %s53 = smul.u32 8, %s52
    %s54 = ssub.s32 1, %s53
    %s55 = smul.u32 16, %s54
    %p56 = scmp.lt.s32.totalorder %s53, 0
    %s57 = scalar_select %p56, %s53, 0
    %s58 = scalar_lea.vmem %s1, %s57
    %s59 = sadd.s32 0, 0
    %p60 = scmp.lt.s32.totalorder %s59, 0
    %s61 = scalar_select %p60, %s59, 0
    %s62 = smul.u32 8, %s61
    %s63 = ssub.s32 1, %s62
    %s64 = smul.u32 16, %s63
    %s65 = sadd.s32 0, 0
    %p66 = scmp.lt.s32.totalorder %s65, 0
    %s67 = scalar_select %p66, %s65, 0
    %s68 = smul.u32 8, %s67
    %s69 = ssub.s32 1, %s68
    %s70 = smul.u32 16, %s69
    %p71 = scmp.lt.s32.totalorder %s68, 0
    %s72 = scalar_select %p71, %s68, 0
    %s73 = scalar_lea.vmem %s1, %s72
    %s74 = sadd.s32 0, 0
    %p75 = scmp.lt.s32.totalorder %s74, 0
    %s76 = scalar_select %p75, %s74, 0
    %s77 = smul.u32 8, %s76
    %s78 = ssub.s32 1, %s77
    %s79 = smul.u32 16, %s78
    %p80 = scmp.eq.s32.totalorder 0, 0
    // Predicated region
    $region14: #{tpu_custom_call.1} parent=1 // pred_check
      %p81 = pneg %p80
    $region15: #{tpu_custom_call.1} parent=1 // pred_check_branch
      %83 = sbr.rel (%p81) target = $region17
    $region16: #{tpu_custom_call.1} parent=1 // pred_region
      %84 = vst [vmem:[#allocation5] sm:$0xff] 0.0
      %85 = vst [vmem:[#allocation5 + $0x8] sm:$0xff] 0.0
      %86 = vst [vmem:[#allocation5 + $0x10] sm:$0xff] 0.0
    $region17: #{tpu_custom_call.1} parent=1 // pred_fallthru
      _
    %s87 = sadd.s32 0, 0
    %s88 = smul.u32 %s87, 8
    %s89 = ssub.s32 1, %s88
    %v90 = vlaneseq
    %v91 = vshrl.u32 %v90, 7
    %v92 = vld [vmem:[#allocation2] sm:$0xff]
    %v93 = vld [vmem:[%s73] sm:$0xff]
    %s94 = ssub.s32 %s89, 0
    %v95 = vstv %s94
    %vm96 = vcmp.lt.s32.totalorder %v91, %v95
    %v97 = vsel %vm96, %v92, 0.0
    %v98 = vsel %vm96, %v93, 0.0
    %v99 = vmul.f32 %v97, %v98
    %v100 = vadd.f32 %v99, 0.0
    %v101 = vmul.f32 %v97, %v97
    %v102 = vadd.f32 %v101, 0.0
    %v103 = vmul.f32 %v98, %v98
    %v104 = vadd.f32 %v103, 0.0
    %v105 = vld [vmem:[#allocation5] sm:$0xff]
    %v106 = vadd.f32 %v105, %v100
    %107 = vst [vmem:[#allocation5] sm:$0xff] %v106
    %s108 = scalar_lea.vmem [#allocation5], 8
    %v109 = vld [vmem:[%s108] sm:$0xff]
    %v110 = vadd.f32 %v109, %v102
    %111 = vst [vmem:[%s108] sm:$0xff] %v110
    %s112 = scalar_lea.vmem [#allocation5], 16
    %v113 = vld [vmem:[%s112] sm:$0xff]
    %v114 = vadd.f32 %v113, %v104
    %115 = vst [vmem:[%s112] sm:$0xff] %v114
    // Predicated region
    $region18: #{tpu_custom_call.1} parent=1 // pred_check
      _
    $region19: #{tpu_custom_call.1} parent=1 // pred_check_branch
      %117 = sbr.rel (0) target = $region21
    $region20: #{tpu_custom_call.1} parent=1 // pred_region
      %s119 = ssub.s32 384, 384
      %120 = vsyncadd [#allocation4], %s119
      %s121 = sshll.u32 [#allocation5], 4
      %s122 = int_to_ptr.vmem [resolvable:$true] %s121
      %127 = dma.vmem_to_hbm [thread:$0]  %s122, 384, %s2, [#allocation4], 128, 128, 8
    $region21: #{tpu_custom_call.1} parent=1 // pred_fallthru
      _
    // Predicated region
    $region22: #{tpu_custom_call.1} parent=1 // pred_check
      _
    $region23: #{tpu_custom_call.1} parent=1 // pred_check_branch
      %129 = sbr.rel (0) target = $region25
    $region24: #{tpu_custom_call.1} parent=1 // pred_region
      %130 = dma.done [#allocation4], 384
    $region25: #{tpu_custom_call.1} parent=1 // pred_fallthru
      _
    %131 = vsyncpa [#allocation3], 1
    %132 = vsyncpa [#allocation4], 1

</llo_original>
